<compile_context>
chip_gen: v7x
topology: tpu7x:2x2x1
jax: 0.10.0
libtpu: 0.0.40
codegen_flags: <defaults>
</compile_context>

<pallas_src>
import numpy as np
import jax
import jax.numpy as jnp
from jax.experimental import pallas as pl
from jax.experimental.pallas import tpu as pltpu

HIDDEN = 32           # self.hidden_size (small synthetic stand-in for SpanBERT hidden size)
INTENT_TYPES_NB = 3   # Intent.intent_types_nb()
SLOT_TYPES_NB = 5     # Slot.slot_types_nb()
VOCAB = 50
N_MAX = 64            # fixed per-tree selector-row budget -> one Mosaic executable per (B, T)

# ---- selector-head layout: heads stacked column-wise into one weight matrix ----
# order: [intent_type] [is_slot_0..NI-1] [slot_type_0..NI-1] [is_intent]
_HEAD_SIZES = ([INTENT_TYPES_NB]
               + [2] * INTENT_TYPES_NB
               + [SLOT_TYPES_NB] * INTENT_TYPES_NB
               + [2])
_HEAD_OFFSETS = np.concatenate([[0], np.cumsum(_HEAD_SIZES)[:-1]]).astype(np.int32)
L_TOTAL = int(np.sum(_HEAD_SIZES))          # 3 + 3*2 + 3*5 + 2 = 26

HEAD_INTENT_TYPE = 0
def HEAD_IS_SLOT(i):   return 1 + i
def HEAD_SLOT_TYPE(i): return 1 + INTENT_TYPES_NB + i
HEAD_IS_INTENT = 1 + 2 * INTENT_TYPES_NB


# ----------------------------- Pallas kernel --------------------------------

def _tree_loss_kernel(gmat_ref, masks_ref, enc_ref, w_ref, b_ref, loss_ref):
    # Per-tree block shapes (leading batch dim squeezed out by `None` in the BlockSpec):
    #   gmat:  (2, N_MAX, T)       f32 0/1 gather matrices [first-token, last-token]
    #   masks: (2, N_MAX, L_TOTAL) f32 [valid-lane mask, target one-hot]
    #   enc:   (T, H)              f32 encoder output for this tree
    #   w:     (2, H, L_TOTAL)     f32 stacked selector weights [first-half, last-half]
    #   b:     (1, L_TOTAL)        f32 stacked selector biases
    #   loss:  (1, 1)              f32 this tree's summed loss
    enc = enc_ref[...]
    xf = jnp.dot(gmat_ref[0], enc, preferred_element_type=jnp.float32)      # (N, H)
    xl = jnp.dot(gmat_ref[1], enc, preferred_element_type=jnp.float32)      # (N, H)
    logits = (jnp.dot(xf, w_ref[0], preferred_element_type=jnp.float32)
              + jnp.dot(xl, w_ref[1], preferred_element_type=jnp.float32)
              + b_ref[...])                                                 # (N, L) f32

    valid = masks_ref[0]    # 1.0 on this row's head lanes; padding rows: lane 0 only
    onehot = masks_ref[1]   # 1.0 on the target lane; padding rows: all-zero -> 0 loss

    # Selector.forward: softmax restricted to this row's head lanes.
    masked = jnp.where(valid > 0.5, logits, -1e30)
    m = jnp.max(masked, axis=-1, keepdims=True)
    e = valid * jnp.exp(masked - m)
    probs = e * pl.reciprocal(jnp.sum(e, axis=-1, keepdims=True), approx=False)

    # TreeMaker.forward feeds the softmaxed probs into torch.cross_entropy, which applies
    # log_softmax again (intentional double softmax). probs are in [0, 1], so a single
    # unstabilized log-sum-exp is safe in f32.
    lse = jnp.log(jnp.sum(valid * jnp.exp(probs), axis=-1, keepdims=True))  # (N, 1)
    row_ce = jnp.sum(onehot * (lse - probs), axis=-1, keepdims=True)        # (N, 1)
    loss_ref[...] = jnp.sum(row_ce, axis=0, keepdims=True)                  # (1, 1)


def _batched_tree_loss(gmat, masks, encoded, w_stacked, b_stacked):
    B, _, n_max, T = gmat.shape
    H = encoded.shape[-1]
    L = masks.shape[-1]
    losses = pl.pallas_call(
        _tree_loss_kernel,
        out_shape=jax.ShapeDtypeStruct((B, 1, 1), jnp.float32),
        grid_spec=pltpu.PrefetchScalarGridSpec(
            num_scalar_prefetch=0,
            grid=(B,),
            in_specs=[
                pl.BlockSpec((None, 2, n_max, T), lambda b: (b, 0, 0, 0)),
                pl.BlockSpec((None, 2, n_max, L), lambda b: (b, 0, 0, 0)),
                pl.BlockSpec((None, T, H), lambda b: (b, 0, 0)),
                pl.BlockSpec((2, H, L), lambda b: (0, 0, 0)),
                pl.BlockSpec((1, L), lambda b: (0, 0)),
            ],
            out_specs=pl.BlockSpec((None, 1, 1), lambda b: (b, 0, 0)),
        ),
        compiler_params=pltpu.CompilerParams(
            dimension_semantics=("parallel",)),        # use both TCs on v7x; no-op on v5e/v6e
    )(gmat, masks, encoded, w_stacked, b_stacked)
    return losses.reshape(B)


# ----------------------- host-side (static) tree flattening -----------------------

def _build_plan(gold_tree, span_coords, cur_intent_idx=None, rows=None):
    """Flatten TreeMaker.forward into rows of (first_tok_idx, last_tok_idx, head_id, target).

    Token indices are into the encoded sequence; tokens_repr = encoded[s0+1 : s1+1], so its
    local position p maps to encoded index s0 + 1 + p.
    """
    if rows is None:
        rows = []
    s0, s1 = int(span_coords[0]), int(span_coords[1])
    S = s1 - s0
    full_first, full_last = s0 + 1, s1
    if gold_tree["kind"] == "intent":
        lab = int(gold_tree["label"])
        rows.append((full_first, full_last, HEAD_INTENT_TYPE, lab))
        gold_spans = {tuple(c["span"]) for c in gold_tree["children"]}
        # is_slot over every sub-span (size S-1 .. 1), CE vs gold child spans.
        for size in range(S - 1, 0, -1):
            for start in range(0, S - size + 1):
                end = start + size
                tgt = 1 if (start, end) in gold_spans else 0
                rows.append((s0 + 1 + start, s0 + end, HEAD_IS_SLOT(lab), tgt))
        for child in gold_tree["children"]:
            _build_plan(child, child["span"], lab, rows)
    else:  # slot node
        rows.append((full_first, full_last, HEAD_SLOT_TYPE(cur_intent_idx),
                     int(gold_tree["label"])))
        is_leaf = len(gold_tree["children"]) == 0
        rows.append((full_first, full_last, HEAD_IS_INTENT, 0 if is_leaf else 1))
        if not is_leaf:
            child = gold_tree["children"][0]
            _build_plan(child, child["span"], None, rows)
    return rows


def _plan_to_dense(rows, seq_len, n_max=N_MAX):
    """Encode the plan as 0/1 gather matrices and lane masks (all static, numpy-only)."""
    n = len(rows)
    assert n <= n_max, f"tree needs {n} selector rows > N_MAX={n_max}"
    gmat = np.zeros((2, n_max, seq_len), np.float32)       # [first-token, last-token] picks
    masks = np.zeros((2, n_max, L_TOTAL), np.float32)      # [valid lanes, target one-hot]
    # Padding rows: one valid lane keeps the inner log-sum finite; the one-hot stays all-zero
    # so their loss contribution is exactly 0 (do not change without re-checking NaN*0 paths).
    masks[0, :, 0] = 1.0
    for r, (f, l, h, t) in enumerate(rows):
        lo = int(_HEAD_OFFSETS[h]); hi = lo + int(_HEAD_SIZES[h])
        gmat[0, r, f] = 1.0
        gmat[1, r, l] = 1.0
        masks[0, r, :] = 0.0
        masks[0, r, lo:hi] = 1.0
        masks[1, r, lo + t] = 1.0
    return gmat, masks


def stack_selector_params(params):
    """Stack every selector head into one weight/bias block. Call ONCE at setup (hoisted
    out of the per-forward path)."""
    ws = [params["intent_type_w"]]
    bs = [params["intent_type_b"]]
    for i in range(INTENT_TYPES_NB):
        ws.append(params["is_slot_w"][i]); bs.append(params["is_slot_b"][i])
    for i in range(INTENT_TYPES_NB):
        ws.append(params["slot_type_w"][i]); bs.append(params["slot_type_b"][i])
    ws.append(params["is_intent_w"]); bs.append(params["is_intent_b"])
    w = jnp.concatenate(ws, axis=1).astype(jnp.float32)            # (2H, L_TOTAL)
    b = jnp.concatenate(bs, axis=0).astype(jnp.float32)            # (L_TOTAL,)
    w_stacked = jnp.stack([w[:HIDDEN], w[HIDDEN:]], axis=0)        # (2, H, L_TOTAL)
    return w_stacked, b.reshape(1, L_TOTAL)


# ----------------------------- batched forward ------------------------------

@jax.jit
def _device_forward(emb, w_enc, w_stacked, b_stacked, tokens_b, gmat_b, masks_b):
    # TODO(synk): the original SpanEncoder wraps a pretrained SpanBERT; substituted with a
    # deterministic embedding lookup + tanh projection (plain JAX — below MXU granularity).
    encoded = jnp.tanh(jnp.take(emb, tokens_b, axis=0) @ w_enc)    # (B, T, H) f32
    return _batched_tree_loss(gmat_b, masks_b, encoded, w_stacked, b_stacked)


def forward_batch(params, stacked_selectors, batch):
    """batch: list of (gold_tree, top_tokens int32 (T,), span_coords). Returns (B,) losses
    from a single pallas_call (one grid step per tree)."""
    T = len(batch[0][1])
    gmats, maskss, tokens = [], [], []
    for gold_tree, top_tokens, span_coords in batch:
        assert len(top_tokens) == T, "all trees in a batch must share the token length"
        rows = _build_plan(gold_tree, span_coords)                 # static Python work
        g, m = _plan_to_dense(rows, T)
        gmats.append(g); maskss.append(m)
        tokens.append(np.asarray(top_tokens, np.int32))
    # one consolidated transfer per array (plans are built entirely host-side)
    gmat_b = jnp.asarray(np.stack(gmats))                          # (B, 2, N_MAX, T)
    masks_b = jnp.asarray(np.stack(maskss))                        # (B, 2, N_MAX, L_TOTAL)
    tokens_b = jnp.asarray(np.stack(tokens))                       # (B, T)
    w_stacked, b_stacked = stacked_selectors
    return _device_forward(params["emb"], params["w_enc"], w_stacked, b_stacked,
                           tokens_b, gmat_b, masks_b)


def forward(params, stacked_selectors, gold_tree, top_tokens, span_coords):
    """Single-tree convenience wrapper (matches the original module's per-call forward)."""
    return forward_batch(params, stacked_selectors,
                         [(gold_tree, top_tokens, span_coords)])[0]


# ----------------------- pure-JAX reference (correctness check) -----------------------

def _selector_ce_ref(x, w, b, targets):
    probs = jax.nn.softmax(x @ w + b, axis=-1)
    logp = jax.nn.log_softmax(probs, axis=-1)
    return -jnp.sum(jnp.take_along_axis(logp, targets[:, None], axis=-1))


def forward_reference(params, gold_tree, top_tokens, span_coords, cur_intent_idx=None):
    emb = jnp.take(params["emb"], top_tokens, axis=0)
    encoded = jnp.tanh(emb @ params["w_enc"])
    s0, s1 = int(span_coords[0]), int(span_coords[1])
    tokens_repr = encoded[s0 + 1:s1 + 1]
    S = tokens_repr.shape[0]
    full_repr = jnp.concatenate([tokens_repr[0:1], tokens_repr[S - 1:S]], axis=1)
    loss = jnp.float32(0.0)
    if gold_tree["kind"] == "intent":
        lab = int(gold_tree["label"])
        loss += _selector_ce_ref(full_repr, params["intent_type_w"], params["intent_type_b"],
                                 jnp.array([lab], jnp.int32))
        gold_spans = {tuple(c["span"]) for c in gold_tree["children"]}
        spans = [(st, st + size) for size in range(S - 1, 0, -1)
                 for st in range(0, S - size + 1)]
        starts = jnp.array([s for s, _ in spans], jnp.int32)
        lasts = jnp.array([e - 1 for _, e in spans], jnp.int32)
        reprs = jnp.concatenate([tokens_repr[starts], tokens_repr[lasts]], axis=1)
        tg = jnp.array([1 if sp in gold_spans else 0 for sp in spans], jnp.int32)
        loss += _selector_ce_ref(reprs, params["is_slot_w"][lab], params["is_slot_b"][lab], tg)
        for child in gold_tree["children"]:
            loss += forward_reference(params, child, top_tokens, child["span"], lab)
    else:
        loss += _selector_ce_ref(full_repr, params["slot_type_w"][cur_intent_idx],
                                 params["slot_type_b"][cur_intent_idx],
                                 jnp.array([int(gold_tree["label"])], jnp.int32))
        is_leaf = len(gold_tree["children"]) == 0
        loss += _selector_ce_ref(full_repr, params["is_intent_w"], params["is_intent_b"],
                                 jnp.array([0 if is_leaf else 1], jnp.int32))
        if not is_leaf:
            child = gold_tree["children"][0]
            loss += forward_reference(params, child, top_tokens, child["span"])
    return loss


# ----------------------------------- main -------------------------------------

if __name__ == "__main__":
    key = jax.random.PRNGKey(0)
    ks = jax.random.split(key, 11)
    params = {
        "emb":           jax.random.normal(ks[0], (VOCAB, HIDDEN), jnp.float32) * 0.1,
        "w_enc":         jax.random.normal(ks[1], (HIDDEN, HIDDEN), jnp.float32) * 0.1,
        "intent_type_w": jax.random.normal(ks[2], (2 * HIDDEN, INTENT_TYPES_NB), jnp.float32) * 0.1,
        "intent_type_b": jax.random.normal(ks[3], (INTENT_TYPES_NB,), jnp.float32) * 0.1,
        "is_intent_w":   jax.random.normal(ks[4], (2 * HIDDEN, 2), jnp.float32) * 0.1,
        "is_intent_b":   jax.random.normal(ks[5], (2,), jnp.float32) * 0.1,
        "is_slot_w":     jax.random.normal(ks[6], (INTENT_TYPES_NB, 2 * HIDDEN, 2), jnp.float32) * 0.1,
        "is_slot_b":     jax.random.normal(ks[7], (INTENT_TYPES_NB, 2), jnp.float32) * 0.1,
        "slot_type_w":   jax.random.normal(ks[8], (INTENT_TYPES_NB, 2 * HIDDEN, SLOT_TYPES_NB), jnp.float32) * 0.1,
        "slot_type_b":   jax.random.normal(ks[9], (INTENT_TYPES_NB, SLOT_TYPES_NB), jnp.float32) * 0.1,
    }
    stacked = stack_selector_params(params)     # ONCE, outside the per-forward path

    T = 12  # encoded sequence length (includes the +1 special-token offset used in slicing)
    top_tokens = np.asarray(jax.random.randint(ks[10], (T,), 0, VOCAB, dtype=jnp.int32))

    trees = [
        {   # intent(1) span [0,8] with one leaf slot child
            "kind": "intent", "label": 1, "span": [0, 8],
            "children": [{"kind": "slot", "label": 3, "span": [2, 5], "children": []}],
        },
        {   # intent(0) span [0,6]; slot child containing a nested intent
            "kind": "intent", "label": 0, "span": [0, 6],
            "children": [{
                "kind": "slot", "label": 2, "span": [1, 3],
                "children": [{"kind": "intent", "label": 2, "span": [1, 3], "children": []}],
            }],
        },
        {   # intent(2) span [0,5] with two leaf slot children
            "kind": "intent", "label": 2, "span": [0, 5],
            "children": [
                {"kind": "slot", "label": 4, "span": [0, 2], "children": []},
                {"kind": "slot", "label": 1, "span": [3, 5], "children": []},
            ],
        },
    ]

    batch = [(t, top_tokens, t["span"]) for t in trees]
    losses = jax.block_until_ready(forward_batch(params, stacked, batch))   # one pallas_call

    tt = jnp.asarray(top_tokens)
    for i, t in enumerate(trees):
        ref = forward_reference(params, t, tt, t["span"])
        assert jnp.isfinite(losses[i]), losses
        assert jnp.allclose(losses[i], ref, rtol=2e-2, atol=2e-2), (i, losses[i], ref)

    # single-tree wrapper agrees with the batched path
    loss_single = jax.block_until_ready(forward(params, stacked, trees[0], top_tokens,
                                                trees[0]["span"]))
    assert jnp.allclose(loss_single, losses[0], rtol=1e-4, atol=1e-4), (loss_single, losses[0])

    print("KERNEL_OK")
</pallas_src>

<mosaic_0001>
module attributes {stable_mosaic.version = 11 : i64} {
  func.func @_tree_loss_kernel(%arg0: i32, %arg1: memref<1x2x64x12xf32, #tpu.memory_space<vmem>>, %arg2: memref<1x2x64x26xf32, #tpu.memory_space<vmem>>, %arg3: memref<1x12x32xf32, #tpu.memory_space<vmem>>, %arg4: memref<2x32x26xf32, #tpu.memory_space<vmem>>, %arg5: memref<1x26xf32, #tpu.memory_space<vmem>>, %arg6: memref<1x1x1xf32, #tpu.memory_space<vmem>>) attributes {dimension_semantics = [#tpu.dimension_semantics<parallel>], iteration_bounds = array<i64: 3>, scalar_prefetch = 0 : i64, scratch_operands = 0 : i64, tpu.core_type = #tpu.core_type<tc>, window_params = [{transform_indices = @transform_0, window_bounds = array<i64: 1, 2, 64, 12>}, {transform_indices = @transform_1, window_bounds = array<i64: 1, 2, 64, 26>}, {transform_indices = @transform_2, window_bounds = array<i64: 1, 12, 32>}, {pipeline_mode = #tpu.pipeline_mode<synchronous>, transform_indices = @transform_3, window_bounds = array<i64: 2, 32, 26>}, {pipeline_mode = #tpu.pipeline_mode<synchronous>, transform_indices = @transform_4, window_bounds = array<i64: 1, 26>}, {transform_indices = @transform_5, window_bounds = array<i64: 1, 1, 1>}]} {
    %c0 = arith.constant 0 : index
    %c0_0 = arith.constant 0 : index
    %c0_1 = arith.constant 0 : index
    %0 = vector.load %arg3[%c0, %c0_0, %c0_1] : memref<1x12x32xf32, #tpu.memory_space<vmem>>, vector<1x12x32xf32>
    %1 = vector.shape_cast %0 : vector<1x12x32xf32> to vector<12x32xf32>
    %c0_2 = arith.constant 0 : index
    %c0_3 = arith.constant 0 : index
    %c0_4 = arith.constant 0 : index
    %c0_5 = arith.constant 0 : index
    %2 = vector.load %arg1[%c0_2, %c0_3, %c0_4, %c0_5] : memref<1x2x64x12xf32, #tpu.memory_space<vmem>>, vector<1x1x64x12xf32>
    %3 = vector.shape_cast %2 : vector<1x1x64x12xf32> to vector<64x12xf32>
    %cst = arith.constant dense<0.000000e+00> : vector<64x32xf32>
    %4 = tpu.matmul %3, %1, %cst {dimension_numbers = #tpu.dot_dimension_numbers<[1], [0], [0], [1], [0, 0, 1, 1], [], []>} : vector<64x12xf32>, vector<12x32xf32>, vector<64x32xf32> -> vector<64x32xf32>
    %c0_6 = arith.constant 0 : index
    %c1 = arith.constant 1 : index
    %c0_7 = arith.constant 0 : index
    %c0_8 = arith.constant 0 : index
    %5 = vector.load %arg1[%c0_6, %c1, %c0_7, %c0_8] : memref<1x2x64x12xf32, #tpu.memory_space<vmem>>, vector<1x1x64x12xf32>
    %6 = vector.shape_cast %5 : vector<1x1x64x12xf32> to vector<64x12xf32>
    %cst_9 = arith.constant dense<0.000000e+00> : vector<64x32xf32>
    %7 = tpu.matmul %6, %1, %cst_9 {dimension_numbers = #tpu.dot_dimension_numbers<[1], [0], [0], [1], [0, 0, 1, 1], [], []>} : vector<64x12xf32>, vector<12x32xf32>, vector<64x32xf32> -> vector<64x32xf32>
    %c0_10 = arith.constant 0 : index
    %c0_11 = arith.constant 0 : index
    %c0_12 = arith.constant 0 : index
    %8 = vector.load %arg4[%c0_10, %c0_11, %c0_12] : memref<2x32x26xf32, #tpu.memory_space<vmem>>, vector<1x32x26xf32>
    %9 = vector.shape_cast %8 : vector<1x32x26xf32> to vector<32x26xf32>
    %cst_13 = arith.constant dense<0.000000e+00> : vector<64x26xf32>
    %10 = tpu.matmul %4, %9, %cst_13 {dimension_numbers = #tpu.dot_dimension_numbers<[1], [0], [0], [1], [0, 0, 1, 1], [], []>} : vector<64x32xf32>, vector<32x26xf32>, vector<64x26xf32> -> vector<64x26xf32>
    %c1_14 = arith.constant 1 : index
    %c0_15 = arith.constant 0 : index
    %c0_16 = arith.constant 0 : index
    %11 = vector.load %arg4[%c1_14, %c0_15, %c0_16] : memref<2x32x26xf32, #tpu.memory_space<vmem>>, vector<1x32x26xf32>
    %12 = vector.shape_cast %11 : vector<1x32x26xf32> to vector<32x26xf32>
    %cst_17 = arith.constant dense<0.000000e+00> : vector<64x26xf32>
    %13 = tpu.matmul %7, %12, %cst_17 {dimension_numbers = #tpu.dot_dimension_numbers<[1], [0], [0], [1], [0, 0, 1, 1], [], []>} : vector<64x32xf32>, vector<32x26xf32>, vector<64x26xf32> -> vector<64x26xf32>
    %14 = arith.addf %10, %13 : vector<64x26xf32>
    %c0_18 = arith.constant 0 : index
    %c0_19 = arith.constant 0 : index
    %15 = vector.load %arg5[%c0_18, %c0_19] : memref<1x26xf32, #tpu.memory_space<vmem>>, vector<1x26xf32>
    %16 = vector.broadcast %15 : vector<1x26xf32> to vector<64x26xf32>
    %17 = arith.addf %14, %16 : vector<64x26xf32>
    %c0_20 = arith.constant 0 : index
    %c0_21 = arith.constant 0 : index
    %c0_22 = arith.constant 0 : index
    %c0_23 = arith.constant 0 : index
    %18 = vector.load %arg2[%c0_20, %c0_21, %c0_22, %c0_23] : memref<1x2x64x26xf32, #tpu.memory_space<vmem>>, vector<1x1x64x26xf32>
    %19 = vector.shape_cast %18 : vector<1x1x64x26xf32> to vector<64x26xf32>
    %c0_24 = arith.constant 0 : index
    %c1_25 = arith.constant 1 : index
    %c0_26 = arith.constant 0 : index
    %c0_27 = arith.constant 0 : index
    %20 = vector.load %arg2[%c0_24, %c1_25, %c0_26, %c0_27] : memref<1x2x64x26xf32, #tpu.memory_space<vmem>>, vector<1x1x64x26xf32>
    %21 = vector.shape_cast %20 : vector<1x1x64x26xf32> to vector<64x26xf32>
    %cst_28 = arith.constant 5.000000e-01 : f32
    %22 = vector.broadcast %cst_28 : f32 to vector<64x26xf32>
    %23 = arith.cmpf ogt, %19, %22 : vector<64x26xf32>
    %cst_29 = arith.constant -1.000000e+30 : f32
    %24 = vector.broadcast %cst_29 : f32 to vector<64x26xf32>
    %25 = arith.select %23, %17, %24 : vector<64x26xi1>, vector<64x26xf32>
    %cst_30 = arith.constant dense<0xFF800000> : vector<64xf32>
    %26 = vector.multi_reduction <maximumf>, %25, %cst_30 [1] : vector<64x26xf32> to vector<64xf32>
    %27 = vector.shape_cast %26 : vector<64xf32> to vector<64x1xf32>
    %28 = vector.broadcast %27 : vector<64x1xf32> to vector<64x26xf32>
    %29 = arith.subf %25, %28 : vector<64x26xf32>
    %30 = math.exp %29 : vector<64x26xf32>
    %31 = arith.mulf %19, %30 : vector<64x26xf32>
    %cst_31 = arith.constant dense<0.000000e+00> : vector<64xf32>
    %32 = vector.multi_reduction <add>, %31, %cst_31 [1] : vector<64x26xf32> to vector<64xf32>
    %33 = vector.shape_cast %32 : vector<64xf32> to vector<64x1xf32>
    %34 = tpu.reciprocal %33 : vector<64x1xf32> -> vector<64x1xf32>
    %35 = vector.broadcast %34 : vector<64x1xf32> to vector<64x26xf32>
    %36 = arith.mulf %31, %35 : vector<64x26xf32>
    %37 = math.exp %36 : vector<64x26xf32>
    %38 = arith.mulf %19, %37 : vector<64x26xf32>
    %cst_32 = arith.constant dense<0.000000e+00> : vector<64xf32>
    %39 = vector.multi_reduction <add>, %38, %cst_32 [1] : vector<64x26xf32> to vector<64xf32>
    %40 = vector.shape_cast %39 : vector<64xf32> to vector<64x1xf32>
    %41 = math.log %40 : vector<64x1xf32>
    %42 = vector.broadcast %41 : vector<64x1xf32> to vector<64x26xf32>
    %43 = arith.subf %42, %36 : vector<64x26xf32>
    %44 = arith.mulf %21, %43 : vector<64x26xf32>
    %cst_33 = arith.constant dense<0.000000e+00> : vector<64xf32>
    %45 = vector.multi_reduction <add>, %44, %cst_33 [1] : vector<64x26xf32> to vector<64xf32>
    %46 = vector.shape_cast %45 : vector<64xf32> to vector<64x1xf32>
    %cst_34 = arith.constant dense<0.000000e+00> : vector<1xf32>
    %47 = vector.multi_reduction <add>, %46, %cst_34 [0] : vector<64x1xf32> to vector<1xf32>
    %48 = vector.shape_cast %47 : vector<1xf32> to vector<1x1xf32>
    %c0_35 = arith.constant 0 : index
    %c0_36 = arith.constant 0 : index
    %c0_37 = arith.constant 0 : index
    %49 = vector.load %arg6[%c0_35, %c0_36, %c0_37] : memref<1x1x1xf32, #tpu.memory_space<vmem>>, vector<1x1x1xf32>
    %50 = vector.shape_cast %49 : vector<1x1x1xf32> to vector<1x1xf32>
    %51 = vector.shape_cast %48 : vector<1x1xf32> to vector<1x1x1xf32>
    tpu.vector_store %arg6[%c0_35, %c0_36, %c0_37], %51 {strides = array<i32>} : memref<1x1x1xf32, #tpu.memory_space<vmem>>, vector<1x1x1xf32>,
    return
  }
  func.func @transform_0(%arg0: i32) -> (i32, i32, i32, i32) {
    %c0_i32 = arith.constant 0 : i32
    %c0_i32_0 = arith.constant 0 : i32
    %c0_i32_1 = arith.constant 0 : i32
    %c0_i32_2 = arith.constant 0 : i32
    return %arg0, %c0_i32, %c0_i32_0, %c0_i32_1 : i32, i32, i32, i32
  }
  func.func @transform_1(%arg0: i32) -> (i32, i32, i32, i32) {
    %c0_i32 = arith.constant 0 : i32
    %c0_i32_0 = arith.constant 0 : i32
    %c0_i32_1 = arith.constant 0 : i32
    %c0_i32_2 = arith.constant 0 : i32
    return %arg0, %c0_i32, %c0_i32_0, %c0_i32_1 : i32, i32, i32, i32
  }
  func.func @transform_2(%arg0: i32) -> (i32, i32, i32) {
    %c0_i32 = arith.constant 0 : i32
    %c0_i32_0 = arith.constant 0 : i32
    %c0_i32_1 = arith.constant 0 : i32
    return %arg0, %c0_i32, %c0_i32_0 : i32, i32, i32
  }
  func.func @transform_3(%arg0: i32) -> (i32, i32, i32) {
    %c0_i32 = arith.constant 0 : i32
    %c0_i32_0 = arith.constant 0 : i32
    %c0_i32_1 = arith.constant 0 : i32
    %c0_i32_2 = arith.constant 0 : i32
    return %c0_i32, %c0_i32_0, %c0_i32_1 : i32, i32, i32
  }
  func.func @transform_4(%arg0: i32) -> (i32, i32) {
    %c0_i32 = arith.constant 0 : i32
    %c0_i32_0 = arith.constant 0 : i32
    %c0_i32_1 = arith.constant 0 : i32
    return %c0_i32, %c0_i32_0 : i32, i32
  }
  func.func @transform_5(%arg0: i32) -> (i32, i32, i32) {
    %c0_i32 = arith.constant 0 : i32
    %c0_i32_0 = arith.constant 0 : i32
    %c0_i32_1 = arith.constant 0 : i32
    return %arg0, %c0_i32, %c0_i32_0 : i32, i32, i32
  }
}

</mosaic_0001>

<llo_original>
// kernel: _device_forward.1
$region0: #{_device_forward.1}
  #allocation0 [shape = 'u32[]', space=smem, size = 0x4, offset = 0x4, fixed_abs, tag = 'smem constant byte address 0x4 - core index']
  #allocation1 [shape = 'u32[144,128]{1,0:T(1,128)}', space=vmem, size = 0x12000, scoped, tag = 'internal scratch']
  %s0 = inlined_call_operand.vmem [shape: f32[3,2,64,12], index: 0, kind: input, shape index: {}]
  %s1 = inlined_call_operand.vmem [shape: f32[3,2,64,26], index: 1, kind: input, shape index: {}]
  %s2 = inlined_call_operand.vmem [shape: f32[3,12,32], index: 2, kind: input, shape index: {}]
  %s3 = inlined_call_operand.vmem [shape: f32[2,32,26], index: 3, kind: input, shape index: {}]
  %s4 = inlined_call_operand.vmem [shape: f32[1,26], index: 4, kind: input, shape index: {}]
  %s5 = inlined_call_operand.vmem [shape: f32[3,1,1], index: 5, kind: output, shape index: {}]
  %s6 = sld [smem:[#allocation0]]
  $region53: #{_device_forward.1} parent=0
    _
  %s8 = ssub.s32 1, %s6
  %s9 = scalar_select 0, %s8, %s6
  loop: start=0, step=1, limit=5
  $region2: #{_device_forward.1} parent=0 // loop_pre_header
    _
  $region3: #{_device_forward.1} parent=0 // loop_header
    %s11 = sphi 0, %s15
    %p12 = scmp.ge.s32.totalorder %s11, 5
    %s21 = sphi 0, %s23
    %s24 = sphi 0, %s21
    %s25 = sphi 0, %s24
    %s41 = sphi 0, %s25
    %s47 = sphi 0, %s49
    %s50 = sphi 0, %s47
    %s51 = sphi 0, %s50
    %s67 = sphi 0, %s51
    %s73 = sphi 0, %s75
    %s76 = sphi 0, %s73
    %s77 = sphi 0, %s76
    %s93 = sphi 0, %s77
    %s97 = sphi 0, %s97
    %s99 = sphi 0, %s97
    %s100 = sphi 0, %s99
    %s114 = sphi 0, %s100
    %s118 = sphi 0, %s118
    %s120 = sphi 0, %s118
    %s121 = sphi 0, %s120
    %s135 = sphi 0, %s121
    %s141 = sphi 0, %s143
    %s144 = sphi 0, %s141
    %s145 = sphi 0, %s144
    %s161 = sphi 0, %s145
  $region4: #{_device_forward.1} parent=0 // loop_header_branch
    %14 = sbr.rel (%p12) target = $region8
  $region5: #{_device_forward.1} parent=0 // loop_body
    %s16 = ssub.s32 %s11, 1
    %s17 = ssub.s32 %s11, 2
    %s18 = sadd.s32 %s11, 1
    %s19 = ssub.s32 %s11, %s18
    %p20 = scmp.eq.s32.totalorder %s19, 0
    %s22 = sadd.s32 %s21, 1
    %s23 = scalar_select %p20, %s21, %s22
    %p26 = pneg %p20
    %p27 = scmp.eq.s32.totalorder %s11, 2
    %p28 = por %p26, %p27
    %p29 = scmp.ne.s32.totalorder %s21, %s24
    %p30 = scmp.eq.s32.totalorder %s11, 0
    %p31 = por %p29, %p30
    %p32 = scmp.ne.s32.totalorder %s21, %s24
    %p33 = scmp.eq.s32.totalorder %s16, 2
    %p34 = por %p32, %p33
    %p35 = scmp.ne.s32.totalorder %s24, %s25
    %p36 = scmp.eq.s32.totalorder %s16, 0
    %p37 = por %p35, %p36
    %p38 = scmp.ne.s32.totalorder %s24, %s25
    %p39 = scmp.eq.s32.totalorder %s17, 2
    %p40 = por %p38, %p39
    %p42 = scmp.ne.s32.totalorder %s25, %s41
    %p43 = scmp.eq.s32.totalorder %s17, 0
    %p44 = por %p42, %p43
    %s45 = ssub.s32 %s11, %s18
    %p46 = scmp.eq.s32.totalorder %s45, 0
    %s48 = sadd.s32 %s47, 1
    %s49 = scalar_select %p46, %s47, %s48
    %p52 = pneg %p46
    %p53 = scmp.eq.s32.totalorder %s11, 2
    %p54 = por %p52, %p53
    %p55 = scmp.ne.s32.totalorder %s47, %s50
    %p56 = scmp.eq.s32.totalorder %s11, 0
    %p57 = por %p55, %p56
    %p58 = scmp.ne.s32.totalorder %s47, %s50
    %p59 = scmp.eq.s32.totalorder %s16, 2
    %p60 = por %p58, %p59
    %p61 = scmp.ne.s32.totalorder %s50, %s51
    %p62 = scmp.eq.s32.totalorder %s16, 0
    %p63 = por %p61, %p62
    %p64 = scmp.ne.s32.totalorder %s50, %s51
    %p65 = scmp.eq.s32.totalorder %s17, 2
    %p66 = por %p64, %p65
    %p68 = scmp.ne.s32.totalorder %s51, %s67
    %p69 = scmp.eq.s32.totalorder %s17, 0
    %p70 = por %p68, %p69
    %s71 = ssub.s32 %s11, %s18
    %p72 = scmp.eq.s32.totalorder %s71, 0
    %s74 = sadd.s32 %s73, 1
    %s75 = scalar_select %p72, %s73, %s74
    %p78 = pneg %p72
    %p79 = scmp.eq.s32.totalorder %s11, 2
    %p80 = por %p78, %p79
    %p81 = scmp.ne.s32.totalorder %s73, %s76
    %p82 = scmp.eq.s32.totalorder %s11, 0
    %p83 = por %p81, %p82
    %p84 = scmp.ne.s32.totalorder %s73, %s76
    %p85 = scmp.eq.s32.totalorder %s16, 2
    %p86 = por %p84, %p85
    %p87 = scmp.ne.s32.totalorder %s76, %s77
    %p88 = scmp.eq.s32.totalorder %s16, 0
    %p89 = por %p87, %p88
    %p90 = scmp.ne.s32.totalorder %s76, %s77
    %p91 = scmp.eq.s32.totalorder %s17, 2
    %p92 = por %p90, %p91
    %p94 = scmp.ne.s32.totalorder %s77, %s93
    %p95 = scmp.eq.s32.totalorder %s17, 0
    %p96 = por %p94, %p95
    %s98 = sadd.s32 %s97, 1
    %p101 = scmp.eq.s32.totalorder %s11, 2
    %p102 = scmp.ne.s32.totalorder %s97, %s99
    %p103 = scmp.eq.s32.totalorder %s11, 0
    %p104 = por %p102, %p103
    %p105 = scmp.ne.s32.totalorder %s97, %s99
    %p106 = scmp.eq.s32.totalorder %s16, 2
    %p107 = por %p105, %p106
    %p108 = scmp.ne.s32.totalorder %s99, %s100
    %p109 = scmp.eq.s32.totalorder %s16, 0
    %p110 = por %p108, %p109
    %p111 = scmp.ne.s32.totalorder %s99, %s100
    %p112 = scmp.eq.s32.totalorder %s17, 2
    %p113 = por %p111, %p112
    %p115 = scmp.ne.s32.totalorder %s100, %s114
    %p116 = scmp.eq.s32.totalorder %s17, 0
    %p117 = por %p115, %p116
    %s119 = sadd.s32 %s118, 1
    %p122 = scmp.eq.s32.totalorder %s11, 2
    %p123 = scmp.ne.s32.totalorder %s118, %s120
    %p124 = scmp.eq.s32.totalorder %s11, 0
    %p125 = por %p123, %p124
    %p126 = scmp.ne.s32.totalorder %s118, %s120
    %p127 = scmp.eq.s32.totalorder %s16, 2
    %p128 = por %p126, %p127
    %p129 = scmp.ne.s32.totalorder %s120, %s121
    %p130 = scmp.eq.s32.totalorder %s16, 0
    %p131 = por %p129, %p130
    %p132 = scmp.ne.s32.totalorder %s120, %s121
    %p133 = scmp.eq.s32.totalorder %s17, 2
    %p134 = por %p132, %p133
    %p136 = scmp.ne.s32.totalorder %s121, %s135
    %p137 = scmp.eq.s32.totalorder %s17, 0
    %p138 = por %p136, %p137
    %s139 = ssub.s32 %s11, %s18
    %p140 = scmp.eq.s32.totalorder %s139, 0
    %s142 = sadd.s32 %s141, 1
    %s143 = scalar_select %p140, %s141, %s142
    %p146 = pneg %p140
    %p147 = scmp.eq.s32.totalorder %s11, 2
    %p148 = por %p146, %p147
    %p149 = scmp.ne.s32.totalorder %s141, %s144
    %p150 = scmp.eq.s32.totalorder %s11, 0
    %p151 = por %p149, %p150
    %p152 = scmp.ne.s32.totalorder %s141, %s144
    %p153 = scmp.eq.s32.totalorder %s16, 2
    %p154 = por %p152, %p153
    %p155 = scmp.ne.s32.totalorder %s144, %s145
    %p156 = scmp.eq.s32.totalorder %s16, 0
    %p157 = por %p155, %p156
    %p158 = scmp.ne.s32.totalorder %s144, %s145
    %p159 = scmp.eq.s32.totalorder %s17, 2
    %p160 = por %p158, %p159
    %p162 = scmp.ne.s32.totalorder %s145, %s161
    %p163 = scmp.eq.s32.totalorder %s17, 0
    %p164 = por %p162, %p163
    %p165 = scmp.le.s32.totalorder 1, %s11
    %p166 = scmp.lt.s32.totalorder %s11, 4
    %p167 = pnand %p165, %p166
    %p168 = pneg %p167
    // Predicated region
    $region9: #{_device_forward.1} parent=5 // pred_check
      _
    $region10: #{_device_forward.1} parent=5 // pred_check_branch
      %170 = sbr.rel (%p167) target = $region12
    $region11: #{_device_forward.1} parent=5 // pred_region
      %s171 = ssub.s32 %s11, 1
      // Predicated region
      $region13: #{_device_forward.1} parent=11 // pred_check
        %p172 = pneg %p110
      $region14: #{_device_forward.1} parent=11 // pred_check_branch
        %174 = sbr.rel (%p172) target = $region16
      $region15: #{_device_forward.1} parent=11 // pred_region
        _
      $region16: #{_device_forward.1} parent=11 // pred_fallthru
        _
      // Predicated region
      $region17: #{_device_forward.1} parent=11 // pred_check
        %p175 = pneg %p131
      $region18: #{_device_forward.1} parent=11 // pred_check_branch
        %177 = sbr.rel (%p175) target = $region20
      $region19: #{_device_forward.1} parent=11 // pred_region
        _
      $region20: #{_device_forward.1} parent=11 // pred_fallthru
        _
    $region12: #{_device_forward.1} parent=5 // pred_fallthru
      _
    %p178 = scmp.lt.s32.totalorder %s11, 3
    // Predicated region
    $region21: #{_device_forward.1} parent=5 // pred_check
      %p179 = pneg %p178
    $region22: #{_device_forward.1} parent=5 // pred_check_branch
      %181 = sbr.rel (%p179) target = $region24
    $region23: #{_device_forward.1} parent=5 // pred_region
      // Predicated region
      $region25: #{_device_forward.1} parent=23 // pred_check
        %p182 = pneg %p31
      $region26: #{_device_forward.1} parent=23 // pred_check_branch
        %184 = sbr.rel (%p182) target = $region28
      $region27: #{_device_forward.1} parent=23 // pred_region
        %p185 = scmp.lt.s32.totalorder %s11, 2
        %s186 = scalar_select %p185, %s11, 2
        %s187 = smul.addr %s186, 16
        %s188 = smul.addr %s187, 8
        %s189 = scalar_lea.vmem %s0, %s188
      $region28: #{_device_forward.1} parent=23 // pred_fallthru
        _
      // Predicated region
      $region29: #{_device_forward.1} parent=23 // pred_check
        %p190 = pneg %p57
      $region30: #{_device_forward.1} parent=23 // pred_check_branch
        %192 = sbr.rel (%p190) target = $region32
      $region31: #{_device_forward.1} parent=23 // pred_region
        %p193 = scmp.lt.s32.totalorder %s11, 2
        %s194 = scalar_select %p193, %s11, 2
        %s195 = smul.addr %s194, 16
        %s196 = smul.addr %s195, 8
        %s197 = scalar_lea.vmem %s1, %s196
      $region32: #{_device_forward.1} parent=23 // pred_fallthru
        _
      // Predicated region
      $region33: #{_device_forward.1} parent=23 // pred_check
        %p198 = pneg %p83
      $region34: #{_device_forward.1} parent=23 // pred_check_branch
        %200 = sbr.rel (%p198) target = $region36
      $region35: #{_device_forward.1} parent=23 // pred_region
        %p201 = scmp.lt.s32.totalorder %s11, 2
        %s202 = scalar_select %p201, %s11, 2
        %s203 = smul.addr %s202, 2
        %s204 = smul.addr %s203, 8
        %s205 = scalar_lea.vmem %s2, %s204
      $region36: #{_device_forward.1} parent=23 // pred_fallthru
        _
    $region24: #{_device_forward.1} parent=5 // pred_fallthru
      _
    %p206 = scmp.le.s32.totalorder 1, %s11
    %p207 = scmp.lt.s32.totalorder %s11, 4
    %p208 = pnand %p206, %p207
    %p209 = pneg %p208
    // Predicated region
    $region37: #{_device_forward.1} parent=5 // pred_check
      _
    $region38: #{_device_forward.1} parent=5 // pred_check_branch
      %211 = sbr.rel (%p208) target = $region40
    $region39: #{_device_forward.1} parent=5 // pred_region
      %s212 = ssub.s32 %s11, 1
      %p213 = scmp.lt.s32.totalorder %s16, 2
      %s214 = scalar_select %p213, %s16, 2
      %s215 = smul.addr %s214, 16
      %s216 = smul.addr %s215, 8
      %s217 = scalar_lea.vmem %s0, %s216
      %p218 = pneg %p37
      %p219 = pneg %p34
      %p220 = scmp.lt.s32.totalorder %s16, 2
      %s221 = scalar_select %p220, %s16, 2
      %s222 = smul.addr %s221, 16
      %s223 = smul.addr %s222, 8
      %s224 = scalar_lea.vmem %s1, %s223
      %p225 = pneg %p63
      %p226 = pneg %p60
      %p227 = scmp.lt.s32.totalorder %s16, 2
      %s228 = scalar_select %p227, %s16, 2
      %s229 = smul.addr %s228, 2
      %s230 = smul.addr %s229, 8
      %s231 = scalar_lea.vmem %s2, %s230
      %p232 = pneg %p89
      %p233 = pneg %p86
      %p234 = pneg %p110
      %p235 = pneg %p107
      %p236 = pneg %p131
      %p237 = pneg %p128
      %p238 = pneg %p157
      %p239 = pneg %p154
      %p240 = scmp.lt.s32.totalorder %s16, 2
      %s241 = scalar_select %p240, %s16, 2
      %s242 = scalar_lea.vmem %s5, %s241
      %p243 = scmp.lt.s32.totalorder %s16, 2
      %s244 = scalar_select %p243, %s16, 2
      %s245 = smul.addr %s244, 16
      %s246 = smul.addr %s245, 8
      %s247 = scalar_lea.vmem %s0, %s246
      %p248 = scmp.lt.s32.totalorder %s16, 2
      %s249 = scalar_select %p248, %s16, 2
      %s250 = smul.addr %s249, 16
      %s251 = smul.addr %s250, 8
      %s252 = scalar_lea.vmem %s1, %s251
      %p253 = scmp.lt.s32.totalorder %s16, 2
      %s254 = scalar_select %p253, %s16, 2
      %s255 = smul.addr %s254, 2
      %s256 = smul.addr %s255, 8
      %s257 = scalar_lea.vmem %s2, %s256
      %p258 = scmp.lt.s32.totalorder %s16, 2
      %s259 = scalar_select %p258, %s16, 2
      %s260 = scalar_lea.vmem %s5, %s259
      %v261 = vld [vmem:[%s257] sm:$0xff]
      %v262 = vld [vmem:[%s257 + $0x8] sm:$0xf]
      %v263 = vld [vmem:[%s247] sm:$0xff]
      %v264 = vld [vmem:[%s247 + $0x8] sm:$0xff]
      %v265 = vld [vmem:[%s247 + $0x10] sm:$0xff]
      %v266 = vld [vmem:[%s247 + $0x18] sm:$0xff]
      %v267 = vld [vmem:[%s247 + $0x20] sm:$0xff]
      %v268 = vld [vmem:[%s247 + $0x28] sm:$0xff]
      %v269 = vld [vmem:[%s247 + $0x30] sm:$0xff]
      %v270 = vld [vmem:[%s247 + $0x38] sm:$0xff]
      %vm271 = vcmask 97280
      %v273 = vsel %vm271, %v263, 0
      %v276 = vsel %vm271, %v264, 0
      %v279 = vsel %vm271, %v265, 0
      %v282 = vsel %vm271, %v266, 0
      %v285 = vsel %vm271, %v267, 0
      %v288 = vsel %vm271, %v268, 0
      %v291 = vsel %vm271, %v269, 0
      %v294 = vsel %vm271, %v270, 0
      %vm296 = vcmask 1043456
      %v298 = vsel %vm296, %v262, 0
      %300 = vmatprep.subr.mxu0 0.0
      %301 = vmatpush1.msra.mxu0 %v261
      %302 = vmatprep.subr.mxu0 0.0
      %303 = vmatpush1.msra.mxu0 %v298
      %304 = vmatprep.subr.mxu0 0.0
      %305 = vmatpush1.msra.mxu0 0.0
      %306 = vmatprep.subr.mxu0 0.0
      %307 = vmatpush1.msra.mxu0 0.0
      %308 = vmatprep.subr.mxu0 0.0
      %309 = vmatpush1.msra.mxu0 0.0
      %310 = vmatprep.subr.mxu0 0.0
      %311 = vmatpush1.msra.mxu0 0.0
      %312 = vmatprep.subr.mxu0 0.0
      %313 = vmatpush1.msra.mxu0 0.0
      %314 = vmatprep.subr.mxu0 0.0
      %315 = vmatpush1.msra.mxu0 0.0
      %316 = vmatprep.subr.mxu0 0.0
      %317 = vmatpush1.msra.mxu0 0.0
      %318 = vmatprep.subr.mxu0 0.0
      %319 = vmatpush1.msra.mxu0 0.0
      %320 = vmatprep.subr.mxu0 0.0
      %321 = vmatpush1.msra.mxu0 0.0
      %322 = vmatprep.subr.mxu0 0.0
      %323 = vmatpush1.msra.mxu0 0.0
      %324 = vmatprep.subr.mxu0 0.0
      %325 = vmatpush1.msra.mxu0 0.0
      %326 = vmatprep.subr.mxu0 0.0
      %327 = vmatpush1.msra.mxu0 0.0
      %328 = vmatprep.subr.mxu0 0.0
      %329 = vmatpush1.msra.mxu0 0.0
      %330 = vmatprep.subr.mxu0 0.0
      %331 = vmatpush1.msra.mxu0 0.0
      %332 = vmatprep.subr.mxu0 0.0
      %333 = vmatpush1.msra.mxu0 0.0
      %334 = vmatprep.subr.mxu0 0.0
      %335 = vmatpush1.msra.mxu0 0.0
      %336 = vmatprep.subr.mxu0 0.0
      %337 = vmatpush1.msra.mxu0 0.0
      %338 = vmatprep.subr.mxu0 0.0
      %339 = vmatpush1.msra.mxu0 0.0
      %340 = vmatprep.subr.mxu0 0.0
      %341 = vmatpush1.msra.mxu0 0.0
      %342 = vmatprep.subr.mxu0 0.0
      %343 = vmatpush1.msra.mxu0 0.0
      %344 = vmatprep.subr.mxu0 0.0
      %345 = vmatpush1.msra.mxu0 0.0
      %346 = vmatprep.subr.mxu0 0.0
      %347 = vmatpush1.msra.mxu0 0.0
      %348 = vmatprep.subr.mxu0 0.0
      %349 = vmatpush1.msra.mxu0 0.0
      %350 = vmatprep.subr.mxu0 0.0
      %351 = vmatpush1.msra.mxu0 0.0
      %352 = vmatprep.subr.mxu0 0.0
      %353 = vmatpush1.msra.mxu0 0.0
      %354 = vmatprep.subr.mxu0 0.0
      %355 = vmatpush1.msra.mxu0 0.0
      %356 = vmatprep.subr.mxu0 0.0
      %357 = vmatpush1.msra.mxu0 0.0
      %358 = vmatprep.subr.mxu0 0.0
      %359 = vmatpush1.msra.mxu0 0.0
      %360 = vmatprep.subr.mxu0 0.0
      %361 = vmatpush1.msra.mxu0 0.0
      %362 = vmatprep.subr.mxu0 0.0
      %363 = vmatpush1.msra.mxu0 0.0
      %364 = vmatprep.mubr.f32.mxu0 0.0
      %365 = vmatmul.mubr.f32.gmra.mrb[0].mxu0 %v273
      %v366 = vpop.f32.mrb[0].mxu0
      %v367 = vadd.f32 0.0, %v366
      %v368 = vpop.f32.mrb[0].mxu0
      %369 = vmatprep.mubr.f32.mxu0 0.0
      %370 = vmatmul.mubr.f32.gmra.mrb[0].mxu0 %v276
      %v371 = vpop.f32.mrb[0].mxu0
      %v372 = vadd.f32 0.0, %v371
      %v373 = vpop.f32.mrb[0].mxu0
      %374 = vmatprep.mubr.f32.mxu0 0.0
      %375 = vmatmul.mubr.f32.gmra.mrb[0].mxu0 %v279
      %v376 = vpop.f32.mrb[0].mxu0
      %v377 = vadd.f32 0.0, %v376
      %v378 = vpop.f32.mrb[0].mxu0
      %379 = vmatprep.mubr.f32.mxu0 0.0
      %380 = vmatmul.mubr.f32.gmra.mrb[0].mxu0 %v282
      %v381 = vpop.f32.mrb[0].mxu0
      %v382 = vadd.f32 0.0, %v381
      %v383 = vpop.f32.mrb[0].mxu0
      %384 = vmatprep.mubr.f32.mxu0 0.0
      %385 = vmatmul.mubr.f32.gmra.mrb[0].mxu0 %v285
      %v386 = vpop.f32.mrb[0].mxu0
      %v387 = vadd.f32 0.0, %v386
      %v388 = vpop.f32.mrb[0].mxu0
      %389 = vmatprep.mubr.f32.mxu0 0.0
      %390 = vmatmul.mubr.f32.gmra.mrb[0].mxu0 %v288
      %v391 = vpop.f32.mrb[0].mxu0
      %v392 = vadd.f32 0.0, %v391
      %v393 = vpop.f32.mrb[0].mxu0
      %394 = vmatprep.mubr.f32.mxu0 0.0
      %395 = vmatmul.mubr.f32.gmra.mrb[0].mxu0 %v291
      %v396 = vpop.f32.mrb[0].mxu0
      %v397 = vadd.f32 0.0, %v396
      %v398 = vpop.f32.mrb[0].mxu0
      %399 = vmatprep.mubr.f32.mxu0 0.0
      %400 = vmatmul.mubr.f32.gmra.mrb[0].mxu0 %v294
      %v401 = vpop.f32.mrb[0].mxu0
      %v402 = vadd.f32 0.0, %v401
      %v403 = vpop.f32.mrb[0].mxu0
      %404 = vdwg.mxu0
      %s405 = scalar_lea.vmem %s247, 64
      %v406 = vld [vmem:[%s405] sm:$0xff]
      %v407 = vld [vmem:[%s405 + $0x8] sm:$0xff]
      %v408 = vld [vmem:[%s405 + $0x10] sm:$0xff]
      %v409 = vld [vmem:[%s405 + $0x18] sm:$0xff]
      %v410 = vld [vmem:[%s405 + $0x20] sm:$0xff]
      %v411 = vld [vmem:[%s405 + $0x28] sm:$0xff]
      %v412 = vld [vmem:[%s405 + $0x30] sm:$0xff]
      %v413 = vld [vmem:[%s405 + $0x38] sm:$0xff]
      %v415 = vsel %vm271, %v406, 0
      %v418 = vsel %vm271, %v407, 0
      %v421 = vsel %vm271, %v408, 0
      %v424 = vsel %vm271, %v409, 0
      %v427 = vsel %vm271, %v410, 0
      %v430 = vsel %vm271, %v411, 0
      %v433 = vsel %vm271, %v412, 0
      %v436 = vsel %vm271, %v413, 0
      %438 = vmatprep.subr.mxu0 0.0
      %439 = vmatpush1.msra.mxu0 %v261
      %440 = vmatprep.subr.mxu0 0.0
      %441 = vmatpush1.msra.mxu0 %v298
      %442 = vmatprep.subr.mxu0 0.0
      %443 = vmatpush1.msra.mxu0 0.0
      %444 = vmatprep.subr.mxu0 0.0
      %445 = vmatpush1.msra.mxu0 0.0
      %446 = vmatprep.subr.mxu0 0.0
      %447 = vmatpush1.msra.mxu0 0.0
      %448 = vmatprep.subr.mxu0 0.0
      %449 = vmatpush1.msra.mxu0 0.0
      %450 = vmatprep.subr.mxu0 0.0
      %451 = vmatpush1.msra.mxu0 0.0
      %452 = vmatprep.subr.mxu0 0.0
      %453 = vmatpush1.msra.mxu0 0.0
      %454 = vmatprep.subr.mxu0 0.0
      %455 = vmatpush1.msra.mxu0 0.0
      %456 = vmatprep.subr.mxu0 0.0
      %457 = vmatpush1.msra.mxu0 0.0
      %458 = vmatprep.subr.mxu0 0.0
      %459 = vmatpush1.msra.mxu0 0.0
      %460 = vmatprep.subr.mxu0 0.0
      %461 = vmatpush1.msra.mxu0 0.0
      %462 = vmatprep.subr.mxu0 0.0
      %463 = vmatpush1.msra.mxu0 0.0
      %464 = vmatprep.subr.mxu0 0.0
      %465 = vmatpush1.msra.mxu0 0.0
      %466 = vmatprep.subr.mxu0 0.0
      %467 = vmatpush1.msra.mxu0 0.0
      %468 = vmatprep.subr.mxu0 0.0
      %469 = vmatpush1.msra.mxu0 0.0
      %470 = vmatprep.subr.mxu0 0.0
      %471 = vmatpush1.msra.mxu0 0.0
      %472 = vmatprep.subr.mxu0 0.0
      %473 = vmatpush1.msra.mxu0 0.0
      %474 = vmatprep.subr.mxu0 0.0
      %475 = vmatpush1.msra.mxu0 0.0
      %476 = vmatprep.subr.mxu0 0.0
      %477 = vmatpush1.msra.mxu0 0.0
      %478 = vmatprep.subr.mxu0 0.0
      %479 = vmatpush1.msra.mxu0 0.0
      %480 = vmatprep.subr.mxu0 0.0
      %481 = vmatpush1.msra.mxu0 0.0
      %482 = vmatprep.subr.mxu0 0.0
      %483 = vmatpush1.msra.mxu0 0.0
      %484 = vmatprep.subr.mxu0 0.0
      %485 = vmatpush1.msra.mxu0 0.0
      %486 = vmatprep.subr.mxu0 0.0
      %487 = vmatpush1.msra.mxu0 0.0
      %488 = vmatprep.subr.mxu0 0.0
      %489 = vmatpush1.msra.mxu0 0.0
      %490 = vmatprep.subr.mxu0 0.0
      %491 = vmatpush1.msra.mxu0 0.0
      %492 = vmatprep.subr.mxu0 0.0
      %493 = vmatpush1.msra.mxu0 0.0
      %494 = vmatprep.subr.mxu0 0.0
      %495 = vmatpush1.msra.mxu0 0.0
      %496 = vmatprep.subr.mxu0 0.0
      %497 = vmatpush1.msra.mxu0 0.0
      %498 = vmatprep.subr.mxu0 0.0
      %499 = vmatpush1.msra.mxu0 0.0
      %500 = vmatprep.subr.mxu0 0.0
      %501 = vmatpush1.msra.mxu0 0.0
      %502 = vmatprep.mubr.f32.mxu0 0.0
      %503 = vmatmul.mubr.f32.gmra.mrb[0].mxu0 %v415
      %v504 = vpop.f32.mrb[0].mxu0
      %v505 = vadd.f32 0.0, %v504
      %v506 = vpop.f32.mrb[0].mxu0
      %507 = vmatprep.mubr.f32.mxu0 0.0
      %508 = vmatmul.mubr.f32.gmra.mrb[0].mxu0 %v418
      %v509 = vpop.f32.mrb[0].mxu0
      %v510 = vadd.f32 0.0, %v509
      %v511 = vpop.f32.mrb[0].mxu0
      %512 = vmatprep.mubr.f32.mxu0 0.0
      %513 = vmatmul.mubr.f32.gmra.mrb[0].mxu0 %v421
      %v514 = vpop.f32.mrb[0].mxu0
      %v515 = vadd.f32 0.0, %v514
      %v516 = vpop.f32.mrb[0].mxu0
      %517 = vmatprep.mubr.f32.mxu0 0.0
      %518 = vmatmul.mubr.f32.gmra.mrb[0].mxu0 %v424
      %v519 = vpop.f32.mrb[0].mxu0
      %v520 = vadd.f32 0.0, %v519
      %v521 = vpop.f32.mrb[0].mxu0
      %522 = vmatprep.mubr.f32.mxu0 0.0
      %523 = vmatmul.mubr.f32.gmra.mrb[0].mxu0 %v427
      %v524 = vpop.f32.mrb[0].mxu0
      %v525 = vadd.f32 0.0, %v524
      %v526 = vpop.f32.mrb[0].mxu0
      %527 = vmatprep.mubr.f32.mxu0 0.0
      %528 = vmatmul.mubr.f32.gmra.mrb[0].mxu0 %v430
      %v529 = vpop.f32.mrb[0].mxu0
      %v530 = vadd.f32 0.0, %v529
      %v531 = vpop.f32.mrb[0].mxu0
      %532 = vmatprep.mubr.f32.mxu0 0.0
      %533 = vmatmul.mubr.f32.gmra.mrb[0].mxu0 %v433
      %v534 = vpop.f32.mrb[0].mxu0
      %v535 = vadd.f32 0.0, %v534
      %v536 = vpop.f32.mrb[0].mxu0
      %537 = vmatprep.mubr.f32.mxu0 0.0
      %538 = vmatmul.mubr.f32.gmra.mrb[0].mxu0 %v436
      %v539 = vpop.f32.mrb[0].mxu0
      %v540 = vadd.f32 0.0, %v539
      %v541 = vpop.f32.mrb[0].mxu0
      %542 = vdwg.mxu0
      %v543 = vld [vmem:[%s3] sm:$0xff]
      %v544 = vld [vmem:[%s3 + $0x8] sm:$0xff]
      %v545 = vld [vmem:[%s3 + $0x10] sm:$0xff]
      %v546 = vld [vmem:[%s3 + $0x18] sm:$0xff]
      %s547 = scalar_lea.vmem %s3, 32
      %v548 = vld [vmem:[%s547] sm:$0xff]
      %v549 = vld [vmem:[%s547 + $0x8] sm:$0xff]
      %v550 = vld [vmem:[%s547 + $0x10] sm:$0xff]
      %v551 = vld [vmem:[%s547 + $0x18] sm:$0xff]
      %vm552 = vcmask 261120
      %v554 = vsel %vm552, %v505, 0
      %v557 = vsel %vm552, %v510, 0
      %v560 = vsel %vm552, %v515, 0
      %v563 = vsel %vm552, %v520, 0
      %v566 = vsel %vm552, %v525, 0
      %v569 = vsel %vm552, %v530, 0
      %v572 = vsel %vm552, %v535, 0
      %v575 = vsel %vm552, %v540, 0
      %577 = vmatprep.subr.mxu0 0.0
      %578 = vmatpush1.msra.mxu0 %v548
      %579 = vmatprep.subr.mxu0 0.0
      %580 = vmatpush1.msra.mxu0 %v549
      %581 = vmatprep.subr.mxu0 0.0
      %582 = vmatpush1.msra.mxu0 %v550
      %583 = vmatprep.subr.mxu0 0.0
      %584 = vmatpush1.msra.mxu0 %v551
      %585 = vmatprep.subr.mxu0 0.0
      %586 = vmatpush1.msra.mxu0 0.0
      %587 = vmatprep.subr.mxu0 0.0
      %588 = vmatpush1.msra.mxu0 0.0
      %589 = vmatprep.subr.mxu0 0.0
      %590 = vmatpush1.msra.mxu0 0.0
      %591 = vmatprep.subr.mxu0 0.0
      %592 = vmatpush1.msra.mxu0 0.0
      %593 = vmatprep.subr.mxu0 0.0
      %594 = vmatpush1.msra.mxu0 0.0
      %595 = vmatprep.subr.mxu0 0.0
      %596 = vmatpush1.msra.mxu0 0.0
      %597 = vmatprep.subr.mxu0 0.0
      %598 = vmatpush1.msra.mxu0 0.0
      %599 = vmatprep.subr.mxu0 0.0
      %600 = vmatpush1.msra.mxu0 0.0
      %601 = vmatprep.subr.mxu0 0.0
      %602 = vmatpush1.msra.mxu0 0.0
      %603 = vmatprep.subr.mxu0 0.0
      %604 = vmatpush1.msra.mxu0 0.0
      %605 = vmatprep.subr.mxu0 0.0
      %606 = vmatpush1.msra.mxu0 0.0
      %607 = vmatprep.subr.mxu0 0.0
      %608 = vmatpush1.msra.mxu0 0.0
      %609 = vmatprep.subr.mxu0 0.0
      %610 = vmatpush1.msra.mxu0 0.0
      %611 = vmatprep.subr.mxu0 0.0
      %612 = vmatpush1.msra.mxu0 0.0
      %613 = vmatprep.subr.mxu0 0.0
      %614 = vmatpush1.msra.mxu0 0.0
      %615 = vmatprep.subr.mxu0 0.0
      %616 = vmatpush1.msra.mxu0 0.0
      %617 = vmatprep.subr.mxu0 0.0
      %618 = vmatpush1.msra.mxu0 0.0
      %619 = vmatprep.subr.mxu0 0.0
      %620 = vmatpush1.msra.mxu0 0.0
      %621 = vmatprep.subr.mxu0 0.0
      %622 = vmatpush1.msra.mxu0 0.0
      %623 = vmatprep.subr.mxu0 0.0
      %624 = vmatpush1.msra.mxu0 0.0
      %625 = vmatprep.subr.mxu0 0.0
      %626 = vmatpush1.msra.mxu0 0.0
      %627 = vmatprep.subr.mxu0 0.0
      %628 = vmatpush1.msra.mxu0 0.0
      %629 = vmatprep.subr.mxu0 0.0
      %630 = vmatpush1.msra.mxu0 0.0
      %631 = vmatprep.subr.mxu0 0.0
      %632 = vmatpush1.msra.mxu0 0.0
      %633 = vmatprep.subr.mxu0 0.0
      %634 = vmatpush1.msra.mxu0 0.0
      %635 = vmatprep.subr.mxu0 0.0
      %636 = vmatpush1.msra.mxu0 0.0
      %637 = vmatprep.subr.mxu0 0.0
      %638 = vmatpush1.msra.mxu0 0.0
      %639 = vmatprep.subr.mxu0 0.0
      %640 = vmatpush1.msra.mxu0 0.0
      %641 = vmatprep.mubr.f32.mxu0 0.0
      %642 = vmatmul.mubr.f32.gmra.mrb[0].mxu0 %v554
      %v643 = vpop.f32.mrb[0].mxu0
      %v644 = vadd.f32 0.0, %v643
      %v645 = vpop.f32.mrb[0].mxu0
      %646 = vmatprep.mubr.f32.mxu0 0.0
      %647 = vmatmul.mubr.f32.gmra.mrb[0].mxu0 %v557
      %v648 = vpop.f32.mrb[0].mxu0
      %v649 = vadd.f32 0.0, %v648
      %v650 = vpop.f32.mrb[0].mxu0
      %651 = vmatprep.mubr.f32.mxu0 0.0
      %652 = vmatmul.mubr.f32.gmra.mrb[0].mxu0 %v560
      %v653 = vpop.f32.mrb[0].mxu0
      %v654 = vadd.f32 0.0, %v653
      %v655 = vpop.f32.mrb[0].mxu0
      %656 = vmatprep.mubr.f32.mxu0 0.0
      %657 = vmatmul.mubr.f32.gmra.mrb[0].mxu0 %v563
      %v658 = vpop.f32.mrb[0].mxu0
      %v659 = vadd.f32 0.0, %v658
      %v660 = vpop.f32.mrb[0].mxu0
      %661 = vmatprep.mubr.f32.mxu0 0.0
      %662 = vmatmul.mubr.f32.gmra.mrb[0].mxu0 %v566
      %v663 = vpop.f32.mrb[0].mxu0
      %v664 = vadd.f32 0.0, %v663
      %v665 = vpop.f32.mrb[0].mxu0
      %666 = vmatprep.mubr.f32.mxu0 0.0
      %667 = vmatmul.mubr.f32.gmra.mrb[0].mxu0 %v569
      %v668 = vpop.f32.mrb[0].mxu0
      %v669 = vadd.f32 0.0, %v668
      %v670 = vpop.f32.mrb[0].mxu0
      %671 = vmatprep.mubr.f32.mxu0 0.0
      %672 = vmatmul.mubr.f32.gmra.mrb[0].mxu0 %v572
      %v673 = vpop.f32.mrb[0].mxu0
      %v674 = vadd.f32 0.0, %v673
      %v675 = vpop.f32.mrb[0].mxu0
      %676 = vmatprep.mubr.f32.mxu0 0.0
      %677 = vmatmul.mubr.f32.gmra.mrb[0].mxu0 %v575
      %v678 = vpop.f32.mrb[0].mxu0
      %v679 = vadd.f32 0.0, %v678
      %v680 = vpop.f32.mrb[0].mxu0
      %681 = vdwg.mxu0
      %v683 = vsel %vm552, %v367, 0
      %v686 = vsel %vm552, %v372, 0
      %v689 = vsel %vm552, %v377, 0
      %v692 = vsel %vm552, %v382, 0
      %v695 = vsel %vm552, %v387, 0
      %v698 = vsel %vm552, %v392, 0
      %v701 = vsel %vm552, %v397, 0
      %v704 = vsel %vm552, %v402, 0
      %706 = vmatprep.subr.mxu0 0.0
      %707 = vmatpush1.msra.mxu0 %v543
      %708 = vmatprep.subr.mxu0 0.0
      %709 = vmatpush1.msra.mxu0 %v544
      %710 = vmatprep.subr.mxu0 0.0
      %711 = vmatpush1.msra.mxu0 %v545
      %712 = vmatprep.subr.mxu0 0.0
      %713 = vmatpush1.msra.mxu0 %v546
      %714 = vmatprep.subr.mxu0 0.0
      %715 = vmatpush1.msra.mxu0 0.0
      %716 = vmatprep.subr.mxu0 0.0
      %717 = vmatpush1.msra.mxu0 0.0
      %718 = vmatprep.subr.mxu0 0.0
      %719 = vmatpush1.msra.mxu0 0.0
      %720 = vmatprep.subr.mxu0 0.0
      %721 = vmatpush1.msra.mxu0 0.0
      %722 = vmatprep.subr.mxu0 0.0
      %723 = vmatpush1.msra.mxu0 0.0
      %724 = vmatprep.subr.mxu0 0.0
      %725 = vmatpush1.msra.mxu0 0.0
      %726 = vmatprep.subr.mxu0 0.0
      %727 = vmatpush1.msra.mxu0 0.0
      %728 = vmatprep.subr.mxu0 0.0
      %729 = vmatpush1.msra.mxu0 0.0
      %730 = vmatprep.subr.mxu0 0.0
      %731 = vmatpush1.msra.mxu0 0.0
      %732 = vmatprep.subr.mxu0 0.0
      %733 = vmatpush1.msra.mxu0 0.0
      %734 = vmatprep.subr.mxu0 0.0
      %735 = vmatpush1.msra.mxu0 0.0
      %736 = vmatprep.subr.mxu0 0.0
      %737 = vmatpush1.msra.mxu0 0.0
      %738 = vmatprep.subr.mxu0 0.0
      %739 = vmatpush1.msra.mxu0 0.0
      %740 = vmatprep.subr.mxu0 0.0
      %741 = vmatpush1.msra.mxu0 0.0
      %742 = vmatprep.subr.mxu0 0.0
      %743 = vmatpush1.msra.mxu0 0.0
      %744 = vmatprep.subr.mxu0 0.0
      %745 = vmatpush1.msra.mxu0 0.0
      %746 = vmatprep.subr.mxu0 0.0
      %747 = vmatpush1.msra.mxu0 0.0
      %748 = vmatprep.subr.mxu0 0.0
      %749 = vmatpush1.msra.mxu0 0.0
      %750 = vmatprep.subr.mxu0 0.0
      %751 = vmatpush1.msra.mxu0 0.0
      %752 = vmatprep.subr.mxu0 0.0
      %753 = vmatpush1.msra.mxu0 0.0
      %754 = vmatprep.subr.mxu0 0.0
      %755 = vmatpush1.msra.mxu0 0.0
      %756 = vmatprep.subr.mxu0 0.0
      %757 = vmatpush1.msra.mxu0 0.0
      %758 = vmatprep.subr.mxu0 0.0
      %759 = vmatpush1.msra.mxu0 0.0
      %760 = vmatprep.subr.mxu0 0.0
      %761 = vmatpush1.msra.mxu0 0.0
      %762 = vmatprep.subr.mxu0 0.0
      %763 = vmatpush1.msra.mxu0 0.0
      %764 = vmatprep.subr.mxu0 0.0
      %765 = vmatpush1.msra.mxu0 0.0
      %766 = vmatprep.subr.mxu0 0.0
      %767 = vmatpush1.msra.mxu0 0.0
      %768 = vmatprep.subr.mxu0 0.0
      %769 = vmatpush1.msra.mxu0 0.0
      %770 = vmatprep.mubr.f32.mxu0 0.0
      %771 = vmatmul.mubr.f32.gmra.mrb[0].mxu0 %v683
      %v772 = vpop.f32.mrb[0].mxu0
      %v773 = vadd.f32 %v644, %v772
      %v774 = vpop.f32.mrb[0].mxu0
      %775 = vmatprep.mubr.f32.mxu0 0.0
      %776 = vmatmul.mubr.f32.gmra.mrb[0].mxu0 %v686
      %v777 = vpop.f32.mrb[0].mxu0
      %v778 = vadd.f32 %v649, %v777
      %v779 = vpop.f32.mrb[0].mxu0
      %780 = vmatprep.mubr.f32.mxu0 0.0
      %781 = vmatmul.mubr.f32.gmra.mrb[0].mxu0 %v689
      %v782 = vpop.f32.mrb[0].mxu0
      %v783 = vadd.f32 %v654, %v782
      %v784 = vpop.f32.mrb[0].mxu0
      %785 = vmatprep.mubr.f32.mxu0 0.0
      %786 = vmatmul.mubr.f32.gmra.mrb[0].mxu0 %v692
      %v787 = vpop.f32.mrb[0].mxu0
      %v788 = vadd.f32 %v659, %v787
      %v789 = vpop.f32.mrb[0].mxu0
      %790 = vmatprep.mubr.f32.mxu0 0.0
      %791 = vmatmul.mubr.f32.gmra.mrb[0].mxu0 %v695
      %v792 = vpop.f32.mrb[0].mxu0
      %v793 = vadd.f32 %v664, %v792
      %v794 = vpop.f32.mrb[0].mxu0
      %795 = vmatprep.mubr.f32.mxu0 0.0
      %796 = vmatmul.mubr.f32.gmra.mrb[0].mxu0 %v698
      %v797 = vpop.f32.mrb[0].mxu0
      %v798 = vadd.f32 %v669, %v797
      %v799 = vpop.f32.mrb[0].mxu0
      %800 = vmatprep.mubr.f32.mxu0 0.0
      %801 = vmatmul.mubr.f32.gmra.mrb[0].mxu0 %v701
      %v802 = vpop.f32.mrb[0].mxu0
      %v803 = vadd.f32 %v674, %v802
      %v804 = vpop.f32.mrb[0].mxu0
      %805 = vmatprep.mubr.f32.mxu0 0.0
      %806 = vmatmul.mubr.f32.gmra.mrb[0].mxu0 %v704
      %v807 = vpop.f32.mrb[0].mxu0
      %v808 = vadd.f32 %v679, %v807
      %v809 = vpop.f32.mrb[0].mxu0
      %810 = vdwg.mxu0
      %v811 = vld [vmem:[%s4] sm:$0x1]
      %v813 = vlaneseq
      %v814 = vshrl.u32 %v813, 7
      %v815 = vsub.s32 0, %v814
      %v816 = vrot.slane %v811, %v815
      %v818 = vadd.f32 %v773, %v816
      %v819 = vadd.f32 %v778, %v816
      %v820 = vadd.f32 %v783, %v816
      %v821 = vadd.f32 %v788, %v816
      %v822 = vadd.f32 %v793, %v816
      %v823 = vadd.f32 %v798, %v816
      %v824 = vadd.f32 %v803, %v816
      %v825 = vadd.f32 %v808, %v816
      %v826 = vld [vmem:[%s252] sm:$0xff]
      %v827 = vld [vmem:[%s252 + $0x8] sm:$0xff]
      %v828 = vld [vmem:[%s252 + $0x10] sm:$0xff]
      %v829 = vld [vmem:[%s252 + $0x18] sm:$0xff]
      %v830 = vld [vmem:[%s252 + $0x20] sm:$0xff]
      %v831 = vld [vmem:[%s252 + $0x28] sm:$0xff]
      %v832 = vld [vmem:[%s252 + $0x30] sm:$0xff]
      %v833 = vld [vmem:[%s252 + $0x38] sm:$0xff]
      %s834 = scalar_lea.vmem %s252, 64
      %v835 = vld [vmem:[%s834] sm:$0xff]
      %v836 = vld [vmem:[%s834 + $0x8] sm:$0xff]
      %v837 = vld [vmem:[%s834 + $0x10] sm:$0xff]
      %v838 = vld [vmem:[%s834 + $0x18] sm:$0xff]
      %v839 = vld [vmem:[%s834 + $0x20] sm:$0xff]
      %v840 = vld [vmem:[%s834 + $0x28] sm:$0xff]
      %v841 = vld [vmem:[%s834 + $0x30] sm:$0xff]
      %v842 = vld [vmem:[%s834 + $0x38] sm:$0xff]
      %vm843 = vcmp.gt.f32.partialorder %v826, 0.5
      %vm844 = vcmp.gt.f32.partialorder %v827, 0.5
      %vm845 = vcmp.gt.f32.partialorder %v828, 0.5
      %vm846 = vcmp.gt.f32.partialorder %v829, 0.5
      %vm847 = vcmp.gt.f32.partialorder %v830, 0.5
      %vm848 = vcmp.gt.f32.partialorder %v831, 0.5
      %vm849 = vcmp.gt.f32.partialorder %v832, 0.5
      %vm850 = vcmp.gt.f32.partialorder %v833, 0.5
      %v851 = vsel %vm843, %v818, -1e+30
      %v852 = vsel %vm844, %v819, -1e+30
      %v853 = vsel %vm845, %v820, -1e+30
      %v854 = vsel %vm846, %v821, -1e+30
      %v855 = vsel %vm847, %v822, -1e+30
      %v856 = vsel %vm848, %v823, -1e+30
      %v857 = vsel %vm849, %v824, -1e+30
      %v858 = vsel %vm850, %v825, -1e+30
      %vm859 = vcmask 211968
      %v860 = vsel %vm859, %v851, -inf
      %861 = vmax.xlane.f32.xlu0 %v860
      %v862 = vpop.xlane.xlu0 %861
      %v863 = vsel %vm859, %v852, -inf
      %864 = vmax.xlane.f32.xlu0 %v863
      %v865 = vpop.xlane.xlu0 %864
      %v866 = vsel %vm859, %v853, -inf
      %867 = vmax.xlane.f32.xlu0 %v866
      %v868 = vpop.xlane.xlu0 %867
      %v869 = vsel %vm859, %v854, -inf
      %870 = vmax.xlane.f32.xlu0 %v869
      %v871 = vpop.xlane.xlu0 %870
      %v872 = vsel %vm859, %v855, -inf
      %873 = vmax.xlane.f32.xlu0 %v872
      %v874 = vpop.xlane.xlu0 %873
      %v875 = vsel %vm859, %v856, -inf
      %876 = vmax.xlane.f32.xlu0 %v875
      %v877 = vpop.xlane.xlu0 %876
      %v878 = vsel %vm859, %v857, -inf
      %879 = vmax.xlane.f32.xlu0 %v878
      %v880 = vpop.xlane.xlu0 %879
      %v881 = vsel %vm859, %v858, -inf
      %882 = vmax.xlane.f32.xlu0 %v881
      %v883 = vpop.xlane.xlu0 %882
      %v884 = vsub.f32 %v851, %v862
      %v885 = vsub.f32 %v852, %v865
      %v886 = vsub.f32 %v853, %v868
      %v887 = vsub.f32 %v854, %v871
      %v888 = vsub.f32 %v855, %v874
      %v889 = vsub.f32 %v856, %v877
      %v890 = vsub.f32 %v857, %v880
      %v891 = vsub.f32 %v858, %v883
      %v892 = vmul.f32 %v884, 1.442695
      %v893 = vpow.pop %v892
      %v894 = vmul.f32 %v885, 1.442695
      %v895 = vpow.pop %v894
      %v896 = vmul.f32 %v886, 1.442695
      %v897 = vpow.pop %v896
      %v898 = vmul.f32 %v887, 1.442695
      %v899 = vpow.pop %v898
      %v900 = vmul.f32 %v888, 1.442695
      %v901 = vpow.pop %v900
      %v902 = vmul.f32 %v889, 1.442695
      %v903 = vpow.pop %v902
      %v904 = vmul.f32 %v890, 1.442695
      %v905 = vpow.pop %v904
      %v906 = vmul.f32 %v891, 1.442695
      %v907 = vpow.pop %v906
      %v908 = vmul.f32 %v826, %v893
      %v909 = vmul.f32 %v827, %v895
      %v910 = vmul.f32 %v828, %v897
      %v911 = vmul.f32 %v829, %v899
      %v912 = vmul.f32 %v830, %v901
      %v913 = vmul.f32 %v831, %v903
      %v914 = vmul.f32 %v832, %v905
      %v915 = vmul.f32 %v833, %v907
      %v916 = vsel %vm859, %v908, 0.0
      %917 = vadd.xlane.f32.xlu0 %v916
      %v918 = vpop.xlane.xlu0 %917
      %v919 = vsel %vm859, %v909, 0.0
      %920 = vadd.xlane.f32.xlu0 %v919
      %v921 = vpop.xlane.xlu0 %920
      %v922 = vsel %vm859, %v910, 0.0
      %923 = vadd.xlane.f32.xlu0 %v922
      %v924 = vpop.xlane.xlu0 %923
      %v925 = vsel %vm859, %v911, 0.0
      %926 = vadd.xlane.f32.xlu0 %v925
      %v927 = vpop.xlane.xlu0 %926
      %v928 = vsel %vm859, %v912, 0.0
      %929 = vadd.xlane.f32.xlu0 %v928
      %v930 = vpop.xlane.xlu0 %929
      %v931 = vsel %vm859, %v913, 0.0
      %932 = vadd.xlane.f32.xlu0 %v931
      %v933 = vpop.xlane.xlu0 %932
      %v934 = vsel %vm859, %v914, 0.0
      %935 = vadd.xlane.f32.xlu0 %v934
      %v936 = vpop.xlane.xlu0 %935
      %v937 = vsel %vm859, %v915, 0.0
      %938 = vadd.xlane.f32.xlu0 %v937
      %v939 = vpop.xlane.xlu0 %938
      %v940 = vrcp.pop %v918
      %v941 = vrcp.pop %v921
      %v942 = vrcp.pop %v924
      %v943 = vrcp.pop %v927
      %v944 = vrcp.pop %v930
      %v945 = vrcp.pop %v933
      %v946 = vrcp.pop %v936
      %v947 = vrcp.pop %v939
      %v948 = vmul.f32 %v908, %v940
      %v949 = vmul.f32 %v909, %v941
      %v950 = vmul.f32 %v910, %v942
      %v951 = vmul.f32 %v911, %v943
      %v952 = vmul.f32 %v912, %v944
      %v953 = vmul.f32 %v913, %v945
      %v954 = vmul.f32 %v914, %v946
      %v955 = vmul.f32 %v915, %v947
      %v956 = vmul.f32 %v948, 1.442695
      %v957 = vpow.pop %v956
      %v958 = vmul.f32 %v949, 1.442695
      %v959 = vpow.pop %v958
      %v960 = vmul.f32 %v950, 1.442695
      %v961 = vpow.pop %v960
      %v962 = vmul.f32 %v951, 1.442695
      %v963 = vpow.pop %v962
      %v964 = vmul.f32 %v952, 1.442695
      %v965 = vpow.pop %v964
      %v966 = vmul.f32 %v953, 1.442695
      %v967 = vpow.pop %v966
      %v968 = vmul.f32 %v954, 1.442695
      %v969 = vpow.pop %v968
      %v970 = vmul.f32 %v955, 1.442695
      %v971 = vpow.pop %v970
      %v972 = vmul.f32 %v826, %v957
      %v973 = vmul.f32 %v827, %v959
      %v974 = vmul.f32 %v828, %v961
      %v975 = vmul.f32 %v829, %v963
      %v976 = vmul.f32 %v830, %v965
      %v977 = vmul.f32 %v831, %v967
      %v978 = vmul.f32 %v832, %v969
      %v979 = vmul.f32 %v833, %v971
      %v980 = vsel %vm859, %v972, 0.0
      %981 = vadd.xlane.f32.xlu0 %v980
      %v982 = vpop.xlane.xlu0 %981
      %v983 = vsel %vm859, %v973, 0.0
      %984 = vadd.xlane.f32.xlu0 %v983
      %v985 = vpop.xlane.xlu0 %984
      %v986 = vsel %vm859, %v974, 0.0
      %987 = vadd.xlane.f32.xlu0 %v986
      %v988 = vpop.xlane.xlu0 %987
      %v989 = vsel %vm859, %v975, 0.0
      %990 = vadd.xlane.f32.xlu0 %v989
      %v991 = vpop.xlane.xlu0 %990
      %v992 = vsel %vm859, %v976, 0.0
      %993 = vadd.xlane.f32.xlu0 %v992
      %v994 = vpop.xlane.xlu0 %993
      %v995 = vsel %vm859, %v977, 0.0
      %996 = vadd.xlane.f32.xlu0 %v995
      %v997 = vpop.xlane.xlu0 %996
      %v998 = vsel %vm859, %v978, 0.0
      %999 = vadd.xlane.f32.xlu0 %v998
      %v1000 = vpop.xlane.xlu0 %999
      %v1001 = vsel %vm859, %v979, 0.0
      %1002 = vadd.xlane.f32.xlu0 %v1001
      %v1003 = vpop.xlane.xlu0 %1002
      %v1004 = vlog2.pop %v982
      %v1005 = vmul.f32 %v1004, 0.6931472
      %v1006 = vlog2.pop %v985
      %v1007 = vmul.f32 %v1006, 0.6931472
      %v1008 = vlog2.pop %v988
      %v1009 = vmul.f32 %v1008, 0.6931472
      %v1010 = vlog2.pop %v991
      %v1011 = vmul.f32 %v1010, 0.6931472
      %v1012 = vlog2.pop %v994
      %v1013 = vmul.f32 %v1012, 0.6931472
      %v1014 = vlog2.pop %v997
      %v1015 = vmul.f32 %v1014, 0.6931472
      %v1016 = vlog2.pop %v1000
      %v1017 = vmul.f32 %v1016, 0.6931472
      %v1018 = vlog2.pop %v1003
      %v1019 = vmul.f32 %v1018, 0.6931472
      %v1020 = vsub.f32 %v1005, %v948
      %v1021 = vsub.f32 %v1007, %v949
      %v1022 = vsub.f32 %v1009, %v950
      %v1023 = vsub.f32 %v1011, %v951
      %v1024 = vsub.f32 %v1013, %v952
      %v1025 = vsub.f32 %v1015, %v953
      %v1026 = vsub.f32 %v1017, %v954
      %v1027 = vsub.f32 %v1019, %v955
      %v1028 = vmul.f32 %v835, %v1020
      %v1029 = vmul.f32 %v836, %v1021
      %v1030 = vmul.f32 %v837, %v1022
      %v1031 = vmul.f32 %v838, %v1023
      %v1032 = vmul.f32 %v839, %v1024
      %v1033 = vmul.f32 %v840, %v1025
      %v1034 = vmul.f32 %v841, %v1026
      %v1035 = vmul.f32 %v842, %v1027
      %v1036 = vsel %vm859, %v1028, 0.0
      %1037 = vadd.xlane.f32.xlu0 %v1036
      %v1038 = vpop.xlane.xlu0 %1037
      %v1039 = vsel %vm859, %v1029, 0.0
      %1040 = vadd.xlane.f32.xlu0 %v1039
      %v1041 = vpop.xlane.xlu0 %1040
      %v1042 = vsel %vm859, %v1030, 0.0
      %1043 = vadd.xlane.f32.xlu0 %v1042
      %v1044 = vpop.xlane.xlu0 %1043
      %v1045 = vsel %vm859, %v1031, 0.0
      %1046 = vadd.xlane.f32.xlu0 %v1045
      %v1047 = vpop.xlane.xlu0 %1046
      %v1048 = vsel %vm859, %v1032, 0.0
      %1049 = vadd.xlane.f32.xlu0 %v1048
      %v1050 = vpop.xlane.xlu0 %1049
      %v1051 = vsel %vm859, %v1033, 0.0
      %1052 = vadd.xlane.f32.xlu0 %v1051
      %v1053 = vpop.xlane.xlu0 %1052
      %v1054 = vsel %vm859, %v1034, 0.0
      %1055 = vadd.xlane.f32.xlu0 %v1054
      %v1056 = vpop.xlane.xlu0 %1055
      %v1057 = vsel %vm859, %v1035, 0.0
      %1058 = vadd.xlane.f32.xlu0 %v1057
      %v1059 = vpop.xlane.xlu0 %1058
      %v1060 = vadd.f32 %v1038, %v1041
      %v1061 = vadd.f32 %v1060, %v1044
      %v1062 = vadd.f32 %v1061, %v1047
      %v1063 = vadd.f32 %v1062, %v1050
      %v1064 = vadd.f32 %v1063, %v1053
      %v1065 = vadd.f32 %v1064, %v1056
      %v1066 = vadd.f32 %v1065, %v1059
      %v1067 = vrot.slane %v1066, 4
      %v1068 = vadd.f32 %v1066, %v1067
      %v1069 = vrot.slane %v1068, 2
      %v1070 = vadd.f32 %v1068, %v1069
      %v1071 = vrot.slane %v1070, 1
      %v1072 = vadd.f32 %v1070, %v1071
      %vm1073 = vcmask 0
      %1074 = vst.msk [vmem:[%s260] sm:$0x1] %vm1073, %v1072
      %p1075 = scmp.lt.s32.totalorder %s16, 2
      %s1076 = scalar_select %p1075, %s16, 2
      %s1077 = scalar_lea.vmem %s5, %s1076
      // Predicated region
      $region41: #{_device_forward.1} parent=39 // pred_check
        %p1078 = pneg %p154
      $region42: #{_device_forward.1} parent=39 // pred_check_branch
        %1080 = sbr.rel (%p1078) target = $region44
      $region43: #{_device_forward.1} parent=39 // pred_region
        _
      $region44: #{_device_forward.1} parent=39 // pred_fallthru
        _
    $region40: #{_device_forward.1} parent=5 // pred_fallthru
      _
    %p1081 = scmp.le.s32.totalorder 2, %s11
    // Predicated region
    $region45: #{_device_forward.1} parent=5 // pred_check
      %p1082 = pneg %p1081
    $region46: #{_device_forward.1} parent=5 // pred_check_branch
      %1084 = sbr.rel (%p1082) target = $region48
    $region47: #{_device_forward.1} parent=5 // pred_region
      %s1085 = ssub.s32 %s11, 2
      // Predicated region
      $region49: #{_device_forward.1} parent=47 // pred_check
        %p1086 = pneg %p160
      $region50: #{_device_forward.1} parent=47 // pred_check_branch
        %1088 = sbr.rel (%p1086) target = $region52
      $region51: #{_device_forward.1} parent=47 // pred_region
        %p1089 = scmp.lt.s32.totalorder %s17, 2
        %s1090 = scalar_select %p1089, %s17, 2
        %s1091 = scalar_lea.vmem %s5, %s1090
      $region52: #{_device_forward.1} parent=47 // pred_fallthru
        _
    $region48: #{_device_forward.1} parent=5 // pred_fallthru
      _
  $region6: #{_device_forward.1} parent=0 // loop_footer
    %s15 = sadd.s32 1, %s11
  $region7: #{_device_forward.1} parent=0 // loop_footer_branch
    %10 = sbr.rel target = $region3
  $region8: #{_device_forward.1} parent=0 // loop_exit
    _

</llo_original>
